<compile_context>
chip_gen: v7x
topology: tpu7x:2x2x1
jax: 0.10.0
libtpu: 0.0.40
codegen_flags: <defaults>
</compile_context>

<pallas_src>
import jax
import jax.numpy as jnp
from jax import lax
from jax.experimental import pallas as pl
from jax.experimental.pallas import tpu as pltpu


def basic_block_kernel(x_ref, w1_ref, b1_ref, w2_ref, b2_ref, o_ref):
    """Bb batch elements per grid step, lane-packed (row, W*C) layout.

    x_ref  : (Bb, H, W*Cin)       f32   raw input (also the residual)
    w1_ref : (3*W*Cin, W*Cout)    bf16  K-stacked banded conv1 weights
    b1_ref : (1, W*Cout)          f32   conv1 bias, tiled over W
    w2_ref : (3*W*Cout, W*Cout)   bf16  K-stacked banded conv2 weights
    b2_ref : (1, W*Cout)          f32   conv2 bias, tiled over W
    o_ref  : (Bb, H, W*Cout)            output (lane-dense last dim)
    """
    Bb, H, WCi = x_ref.shape
    WCo = o_ref.shape[2]

    x_f32 = x_ref[...]                                   # (Bb, H, WCi) f32
    x_bf = x_f32.astype(jnp.bfloat16)                    # cast once (hoisted)

    # ---- conv1: one deep-K MXU dot (K = 3*WCi), f32 accumulation ----
    zrow_i = jnp.zeros((Bb, 1, WCi), jnp.bfloat16)
    xp = jnp.concatenate([zrow_i, x_bf, zrow_i], axis=1)          # (Bb, H+2, WCi)
    lhs1 = jnp.concatenate(
        [xp[:, 0:H, :], xp[:, 1:H + 1, :], xp[:, 2:H + 2, :]], axis=-1
    ).reshape(Bb * H, 3 * WCi)                                    # (Bb*H, 3*WCi)
    y1 = jnp.dot(lhs1, w1_ref[...],
                 preferred_element_type=jnp.float32) + b1_ref[...]  # (Bb*H, WCo)

    # ---- conv2: zero-row halo lives in vregs, cast once ----
    y1_bf = y1.astype(jnp.bfloat16).reshape(Bb, H, WCo)
    zrow_o = jnp.zeros((Bb, 1, WCo), jnp.bfloat16)
    yp = jnp.concatenate([zrow_o, y1_bf, zrow_o], axis=1)         # (Bb, H+2, WCo)
    lhs2 = jnp.concatenate(
        [yp[:, 0:H, :], yp[:, 1:H + 1, :], yp[:, 2:H + 2, :]], axis=-1
    ).reshape(Bb * H, 3 * WCo)
    y2 = jnp.dot(lhs2, w2_ref[...],
                 preferred_element_type=jnp.float32) + b2_ref[...]  # (Bb*H, WCo)

    # ---- residual add (f32 path) + ReLU ----
    out = jnp.maximum(x_f32.reshape(Bb * H, WCi) + y2, 0.0)
    o_ref[...] = out.reshape(Bb, H, WCo).astype(o_ref.dtype)


def _band_weights(w, W):
    """Turn HWIO conv weights (kh, kw, Cin, Cout), stride 1 / pad 1, into a
    single K-stacked block-banded matrix of shape (kh*W*Cin, W*Cout) such that
        out_flat[h] = concat_dh(x_flat_padded[h+dh]) @ band
    where x_flat is the lane-packed (rows, W*Cin) layout and the row halo is a
    zero row above/below.  Horizontal padding is realized by dropping
    out-of-range taps (zero columns in the band).
    """
    kh, kw, Cin, Cout = w.shape
    s = jnp.arange(W)[None, :, None]              # source (input) column
    t = jnp.arange(W)[None, None, :]              # target (output) column
    d = jnp.arange(kw)[:, None, None]             # kw tap
    sel = (s == t + d - 1).astype(w.dtype)        # (kw, W, W)
    band = jnp.einsum('dsw,hdio->hsiwo', sel, w)  # (kh, W, Cin, W, Cout)
    return band.reshape(kh * W * Cin, W * Cout)


def _choose_bb(B, H, rows_target=256):
    """Batch elements per grid step: keep Bb*H live rows <= rows_target (vreg
    budget) and keep >= 2 grid steps when B >= 2 (v7x megacore split)."""
    bb = max(1, min(B, rows_target // max(H, 1)))
    if B >= 2:
        bb = max(1, min(bb, B // 2))
    while B % bb != 0:
        bb -= 1
    return bb


def basic_block(x, w1, b1, w2, b2):
    """x: (B, H, W, C) NHWC float32; w*: (3, 3, C, C) HWIO; b*: (C,)."""
    B, H, W, Cin = x.shape
    Cout = w1.shape[-1]
    assert Cin == Cout, "downsample=None requires in_channels == out_channels"
    WC_in = W * Cin
    WC_out = W * Cout
    Bb = _choose_bb(B, H)

    # glue: lane-pack only (row halo is built in-kernel, horizontal pad is in bands)
    xf = x.reshape(B, H, WC_in)
    w1b = _band_weights(w1.astype(jnp.float32), W).astype(jnp.bfloat16)
    w2b = _band_weights(w2.astype(jnp.float32), W).astype(jnp.bfloat16)
    b1f = jnp.tile(b1.astype(jnp.float32), W).reshape(1, WC_out)
    b2f = jnp.tile(b2.astype(jnp.float32), W).reshape(1, WC_out)

    out_flat = pl.pallas_call(
        basic_block_kernel,
        out_shape=jax.ShapeDtypeStruct((B, H, WC_out), x.dtype),
        grid_spec=pltpu.PrefetchScalarGridSpec(
            num_scalar_prefetch=0,
            grid=(B // Bb,),
            in_specs=[
                pl.BlockSpec((Bb, H, WC_in),          lambda b: (b, 0, 0)),
                pl.BlockSpec((3 * WC_in, WC_out),     lambda b: (0, 0)),
                pl.BlockSpec((1, WC_out),             lambda b: (0, 0)),
                pl.BlockSpec((3 * WC_out, WC_out),    lambda b: (0, 0)),
                pl.BlockSpec((1, WC_out),             lambda b: (0, 0)),
            ],
            out_specs=pl.BlockSpec((Bb, H, WC_out),   lambda b: (b, 0, 0)),
        ),
        compiler_params=pltpu.CompilerParams(
            dimension_semantics=("parallel",),
            vmem_limit_bytes=32 * 1024 * 1024),
    )(xf, w1b, b1f, w2b, b2f)

    return out_flat.reshape(B, H, W, Cout)


# ---- pure-JAX reference (for correctness check) ----
def _conv2d_nhwc(x, w, b):
    y = lax.conv_general_dilated(
        x, w, window_strides=(1, 1), padding=((1, 1), (1, 1)),
        dimension_numbers=("NHWC", "HWIO", "NHWC"),
        precision=lax.Precision.HIGHEST)
    return y + b.reshape(1, 1, 1, -1)


def basic_block_ref(x, w1, b1, w2, b2):
    out = _conv2d_nhwc(x, w1, b1)
    out = _conv2d_nhwc(out, w2, b2)
    return jnp.maximum(x + out, 0.0)


if __name__ == "__main__":
    key = jax.random.PRNGKey(0)
    B, H, W, C = 2, 16, 16, 8      # in_channels == out_channels == 8, downsample=None
    k1, k2, k3, k4, k5 = jax.random.split(key, 5)

    x = jax.random.normal(k1, (B, H, W, C), jnp.float32)
    w1 = jax.random.normal(k2, (3, 3, C, C), jnp.float32) * 0.1
    b1 = jax.random.normal(k3, (C,), jnp.float32) * 0.1
    w2 = jax.random.normal(k4, (3, 3, C, C), jnp.float32) * 0.1
    b2 = jax.random.normal(k5, (C,), jnp.float32) * 0.1

    out = basic_block(x, w1, b1, w2, b2)
    jax.block_until_ready(out)

    ref = basic_block_ref(x, w1, b1, w2, b2)
    max_err = float(jnp.max(jnp.abs(out - ref)))
    assert out.shape == (B, H, W, C)
    # bf16 MXU operands with f32 accumulation -> loosen tolerance accordingly
    assert jnp.allclose(out, ref, atol=5e-2, rtol=5e-2), f"max abs err={max_err}"

    print("KERNEL_OK")
</pallas_src>

<mosaic_0001>
module attributes {stable_mosaic.version = 11 : i64} {
  func.func @basic_block_kernel(%arg0: i32, %arg1: memref<1x16x128xf32, #tpu.memory_space<vmem>>, %arg2: memref<384x128xbf16, #tpu.memory_space<vmem>>, %arg3: memref<1x128xf32, #tpu.memory_space<vmem>>, %arg4: memref<384x128xbf16, #tpu.memory_space<vmem>>, %arg5: memref<1x128xf32, #tpu.memory_space<vmem>>, %arg6: memref<1x16x128xf32, #tpu.memory_space<vmem>>) attributes {dimension_semantics = [#tpu.dimension_semantics<parallel>], iteration_bounds = array<i64: 2>, scalar_prefetch = 0 : i64, scratch_operands = 0 : i64, tpu.core_type = #tpu.core_type<tc>, window_params = [{transform_indices = @transform_0, window_bounds = array<i64: 1, 16, 128>}, {pipeline_mode = #tpu.pipeline_mode<synchronous>, transform_indices = @transform_1, window_bounds = array<i64: 384, 128>}, {pipeline_mode = #tpu.pipeline_mode<synchronous>, transform_indices = @transform_2, window_bounds = array<i64: 1, 128>}, {pipeline_mode = #tpu.pipeline_mode<synchronous>, transform_indices = @transform_3, window_bounds = array<i64: 384, 128>}, {pipeline_mode = #tpu.pipeline_mode<synchronous>, transform_indices = @transform_4, window_bounds = array<i64: 1, 128>}, {transform_indices = @transform_5, window_bounds = array<i64: 1, 16, 128>}]} {
    %c0 = arith.constant 0 : index
    %c0_0 = arith.constant 0 : index
    %c0_1 = arith.constant 0 : index
    %0 = vector.load %arg1[%c0, %c0_0, %c0_1] : memref<1x16x128xf32, #tpu.memory_space<vmem>>, vector<1x16x128xf32>
    %1 = arith.truncf %0 : vector<1x16x128xf32> to vector<1x16x128xbf16>
    %cst = arith.constant 0.000000e+00 : bf16
    %2 = vector.broadcast %cst : bf16 to vector<1x1x128xbf16>
    %3 = tpu.concatenate %2, %1, %2 in 1 : vector<1x1x128xbf16>, vector<1x16x128xbf16>, vector<1x1x128xbf16> -> vector<1x18x128xbf16>
    %4 = vector.extract_strided_slice %3 {offsets = [0, 0, 0], sizes = [1, 16, 128], strides = [1, 1, 1]} : vector<1x18x128xbf16> to vector<1x16x128xbf16>
    %5 = vector.extract_strided_slice %3 {offsets = [0, 1, 0], sizes = [1, 16, 128], strides = [1, 1, 1]} : vector<1x18x128xbf16> to vector<1x16x128xbf16>
    %6 = vector.extract_strided_slice %3 {offsets = [0, 2, 0], sizes = [1, 16, 128], strides = [1, 1, 1]} : vector<1x18x128xbf16> to vector<1x16x128xbf16>
    %7 = tpu.concatenate %4, %5, %6 in 2 : vector<1x16x128xbf16>, vector<1x16x128xbf16>, vector<1x16x128xbf16> -> vector<1x16x384xbf16>
    %8 = vector.shape_cast %7 : vector<1x16x384xbf16> to vector<16x384xbf16>
    %c0_2 = arith.constant 0 : index
    %c0_3 = arith.constant 0 : index
    %9 = vector.load %arg2[%c0_2, %c0_3] : memref<384x128xbf16, #tpu.memory_space<vmem>>, vector<384x128xbf16>
    %cst_4 = arith.constant dense<0.000000e+00> : vector<16x128xf32>
    %10 = tpu.matmul %8, %9, %cst_4 {dimension_numbers = #tpu.dot_dimension_numbers<[1], [0], [0], [1], [0, 0, 1, 1], [], []>} : vector<16x384xbf16>, vector<384x128xbf16>, vector<16x128xf32> -> vector<16x128xf32>
    %c0_5 = arith.constant 0 : index
    %c0_6 = arith.constant 0 : index
    %11 = vector.load %arg3[%c0_5, %c0_6] : memref<1x128xf32, #tpu.memory_space<vmem>>, vector<1x128xf32>
    %12 = vector.broadcast %11 : vector<1x128xf32> to vector<16x128xf32>
    %13 = arith.addf %10, %12 : vector<16x128xf32>
    %14 = arith.truncf %13 : vector<16x128xf32> to vector<16x128xbf16>
    %15 = vector.shape_cast %14 : vector<16x128xbf16> to vector<1x16x128xbf16>
    %cst_7 = arith.constant 0.000000e+00 : bf16
    %16 = vector.broadcast %cst_7 : bf16 to vector<1x1x128xbf16>
    %17 = tpu.concatenate %16, %15, %16 in 1 : vector<1x1x128xbf16>, vector<1x16x128xbf16>, vector<1x1x128xbf16> -> vector<1x18x128xbf16>
    %18 = vector.extract_strided_slice %17 {offsets = [0, 0, 0], sizes = [1, 16, 128], strides = [1, 1, 1]} : vector<1x18x128xbf16> to vector<1x16x128xbf16>
    %19 = vector.extract_strided_slice %17 {offsets = [0, 1, 0], sizes = [1, 16, 128], strides = [1, 1, 1]} : vector<1x18x128xbf16> to vector<1x16x128xbf16>
    %20 = vector.extract_strided_slice %17 {offsets = [0, 2, 0], sizes = [1, 16, 128], strides = [1, 1, 1]} : vector<1x18x128xbf16> to vector<1x16x128xbf16>
    %21 = tpu.concatenate %18, %19, %20 in 2 : vector<1x16x128xbf16>, vector<1x16x128xbf16>, vector<1x16x128xbf16> -> vector<1x16x384xbf16>
    %22 = vector.shape_cast %21 : vector<1x16x384xbf16> to vector<16x384xbf16>
    %c0_8 = arith.constant 0 : index
    %c0_9 = arith.constant 0 : index
    %23 = vector.load %arg4[%c0_8, %c0_9] : memref<384x128xbf16, #tpu.memory_space<vmem>>, vector<384x128xbf16>
    %cst_10 = arith.constant dense<0.000000e+00> : vector<16x128xf32>
    %24 = tpu.matmul %22, %23, %cst_10 {dimension_numbers = #tpu.dot_dimension_numbers<[1], [0], [0], [1], [0, 0, 1, 1], [], []>} : vector<16x384xbf16>, vector<384x128xbf16>, vector<16x128xf32> -> vector<16x128xf32>
    %c0_11 = arith.constant 0 : index
    %c0_12 = arith.constant 0 : index
    %25 = vector.load %arg5[%c0_11, %c0_12] : memref<1x128xf32, #tpu.memory_space<vmem>>, vector<1x128xf32>
    %26 = vector.broadcast %25 : vector<1x128xf32> to vector<16x128xf32>
    %27 = arith.addf %24, %26 : vector<16x128xf32>
    %28 = vector.shape_cast %0 : vector<1x16x128xf32> to vector<16x128xf32>
    %29 = arith.addf %28, %27 : vector<16x128xf32>
    %cst_13 = arith.constant 0.000000e+00 : f32
    %30 = vector.broadcast %cst_13 : f32 to vector<16x128xf32>
    %31 = arith.maximumf %29, %30 : vector<16x128xf32>
    %32 = vector.shape_cast %31 : vector<16x128xf32> to vector<1x16x128xf32>
    %c0_14 = arith.constant 0 : index
    %c0_15 = arith.constant 0 : index
    %c0_16 = arith.constant 0 : index
    %33 = vector.load %arg6[%c0_14, %c0_15, %c0_16] : memref<1x16x128xf32, #tpu.memory_space<vmem>>, vector<1x16x128xf32>
    tpu.vector_store %arg6[%c0_14, %c0_15, %c0_16], %32 {strides = array<i32>} : memref<1x16x128xf32, #tpu.memory_space<vmem>>, vector<1x16x128xf32>,
    return
  }
  func.func @transform_0(%arg0: i32) -> (i32, i32, i32) {
    %c0_i32 = arith.constant 0 : i32
    %c0_i32_0 = arith.constant 0 : i32
    %c0_i32_1 = arith.constant 0 : i32
    return %arg0, %c0_i32, %c0_i32_0 : i32, i32, i32
  }
  func.func @transform_1(%arg0: i32) -> (i32, i32) {
    %c0_i32 = arith.constant 0 : i32
    %c0_i32_0 = arith.constant 0 : i32
    %c0_i32_1 = arith.constant 0 : i32
    return %c0_i32, %c0_i32_0 : i32, i32
  }
  func.func @transform_2(%arg0: i32) -> (i32, i32) {
    %c0_i32 = arith.constant 0 : i32
    %c0_i32_0 = arith.constant 0 : i32
    %c0_i32_1 = arith.constant 0 : i32
    return %c0_i32, %c0_i32_0 : i32, i32
  }
  func.func @transform_3(%arg0: i32) -> (i32, i32) {
    %c0_i32 = arith.constant 0 : i32
    %c0_i32_0 = arith.constant 0 : i32
    %c0_i32_1 = arith.constant 0 : i32
    return %c0_i32, %c0_i32_0 : i32, i32
  }
  func.func @transform_4(%arg0: i32) -> (i32, i32) {
    %c0_i32 = arith.constant 0 : i32
    %c0_i32_0 = arith.constant 0 : i32
    %c0_i32_1 = arith.constant 0 : i32
    return %c0_i32, %c0_i32_0 : i32, i32
  }
  func.func @transform_5(%arg0: i32) -> (i32, i32, i32) {
    %c0_i32 = arith.constant 0 : i32
    %c0_i32_0 = arith.constant 0 : i32
    %c0_i32_1 = arith.constant 0 : i32
    return %arg0, %c0_i32, %c0_i32_0 : i32, i32, i32
  }
}

</mosaic_0001>

<llo_original>
// kernel: tpu_custom_call.1
$region0: #{tpu_custom_call.1}
  #allocation0 [shape = 'u32[]', space=smem, size = 0x4, offset = 0x4, fixed_abs, tag = 'smem constant byte address 0x4 - core index']
  #allocation1 [shape = 'u32[144,128]{1,0:T(1,128)}', space=vmem, size = 0x12000, scoped, tag = 'internal scratch']
  %s0 = inlined_call_operand.hbm [shape: f32[2,16,128], index: 0, kind: input, shape index: {}]
  %s1 = inlined_call_operand.hbm [shape: bf16[384,128], index: 1, kind: input, shape index: {}]
  %s2 = inlined_call_operand.vmem [shape: f32[1,128], index: 2, kind: input, shape index: {}]
  %s3 = inlined_call_operand.hbm [shape: bf16[384,128], index: 3, kind: input, shape index: {}]
  %s4 = inlined_call_operand.vmem [shape: f32[1,128], index: 4, kind: input, shape index: {}]
  %s5 = inlined_call_operand.hbm [shape: f32[2,16,128], index: 5, kind: output, shape index: {}]
  %s6 = sld [smem:[#allocation0]]
  $region65: #{tpu_custom_call.1} parent=0
    _
  %s8 = ssub.s32 1, %s6
  %s9 = scalar_select 0, %s8, %s6
  $region1: #{tpu_custom_call.1} parent=0
    #allocation2 [shape = 'u8[16384]{0}', space=vmem, size = 0x4000, scoped, tag = 'input window, operand 0']
    #allocation3 [shape = 's32[2]{0}', space=sflag, size = 0x8, scoped, tag = 'scoped memory for tpu_custom_call.1']
    #allocation4 [shape = 's32[2]{0}', space=sflag, size = 0x8, scoped, tag = 'scoped memory for tpu_custom_call.1']
    #allocation5 [shape = 'u8[98304]{0}', space=vmem, size = 0x18000, scoped, tag = 'input window, operand 1, single buffered']
    #allocation6 [shape = 's32[1]{0}', space=sflag, size = 0x4, scoped, tag = 'scoped memory for tpu_custom_call.1']
    #allocation7 [shape = 'u8[98304]{0}', space=vmem, size = 0x18000, scoped, tag = 'input window, operand 3, single buffered']
    #allocation8 [shape = 'u8[16384]{0}', space=vmem, size = 0x4000, scoped, tag = 'output window, operand 0']
    %10 = vsyncpa [#allocation3], 0
    %s11 = scalar_lea.sflag [#allocation3], 1
    %12 = vsyncpa %s11, 0
    %13 = vsyncpa [#allocation6], 0
    %14 = vsyncpa [#allocation4], 0
    %s15 = scalar_lea.sflag [#allocation4], 1
    %16 = vsyncpa %s15, 0
    loop: start=0, step=1, limit=4
    $region2: #{tpu_custom_call.1} parent=1 // loop_pre_header
      _
    $region3: #{tpu_custom_call.1} parent=1 // loop_header
      %s18 = sphi 0, %s22
      %p19 = scmp.ge.s32.totalorder %s18, 4
      %s28 = sphi 0, %s30
      %s31 = sphi 0, %s28
      %s32 = sphi 0, %s31
      %s48 = sphi 0, %s32
      %s52 = sphi 0, %s52
      %s54 = sphi 0, %s52
      %s55 = sphi 0, %s54
      %s69 = sphi 0, %s55
      %s73 = sphi 0, %s73
      %s75 = sphi 0, %s73
      %s76 = sphi 0, %s75
      %s90 = sphi 0, %s76
      %s94 = sphi 0, %s94
      %s96 = sphi 0, %s94
      %s97 = sphi 0, %s96
      %s111 = sphi 0, %s97
      %s115 = sphi 0, %s115
      %s117 = sphi 0, %s115
      %s118 = sphi 0, %s117
      %s132 = sphi 0, %s118
      %s138 = sphi 0, %s140
      %s141 = sphi 0, %s138
      %s142 = sphi 0, %s141
      %s158 = sphi 0, %s142
    $region4: #{tpu_custom_call.1} parent=1 // loop_header_branch
      %21 = sbr.rel (%p19) target = $region8
    $region5: #{tpu_custom_call.1} parent=1 // loop_body
      %s23 = ssub.s32 %s18, 1
      %s24 = ssub.s32 %s18, 2
      %s25 = sadd.s32 %s18, 1
      %s26 = ssub.s32 %s18, %s25
      %p27 = scmp.eq.s32.totalorder %s26, 0
      %s29 = sadd.s32 %s28, 1
      %s30 = scalar_select %p27, %s28, %s29
      %p33 = pneg %p27
      %p34 = scmp.eq.s32.totalorder %s18, 1
      %p35 = por %p33, %p34
      %p36 = scmp.ne.s32.totalorder %s28, %s31
      %p37 = scmp.eq.s32.totalorder %s18, 0
      %p38 = por %p36, %p37
      %p39 = scmp.ne.s32.totalorder %s28, %s31
      %p40 = scmp.eq.s32.totalorder %s23, 1
      %p41 = por %p39, %p40
      %p42 = scmp.ne.s32.totalorder %s31, %s32
      %p43 = scmp.eq.s32.totalorder %s23, 0
      %p44 = por %p42, %p43
      %p45 = scmp.ne.s32.totalorder %s31, %s32
      %p46 = scmp.eq.s32.totalorder %s24, 1
      %p47 = por %p45, %p46
      %p49 = scmp.ne.s32.totalorder %s32, %s48
      %p50 = scmp.eq.s32.totalorder %s24, 0
      %p51 = por %p49, %p50
      %s53 = sadd.s32 %s52, 1
      %p56 = scmp.eq.s32.totalorder %s18, 1
      %p57 = scmp.ne.s32.totalorder %s52, %s54
      %p58 = scmp.eq.s32.totalorder %s18, 0
      %p59 = por %p57, %p58
      %p60 = scmp.ne.s32.totalorder %s52, %s54
      %p61 = scmp.eq.s32.totalorder %s23, 1
      %p62 = por %p60, %p61
      %p63 = scmp.ne.s32.totalorder %s54, %s55
      %p64 = scmp.eq.s32.totalorder %s23, 0
      %p65 = por %p63, %p64
      %p66 = scmp.ne.s32.totalorder %s54, %s55
      %p67 = scmp.eq.s32.totalorder %s24, 1
      %p68 = por %p66, %p67
      %p70 = scmp.ne.s32.totalorder %s55, %s69
      %p71 = scmp.eq.s32.totalorder %s24, 0
      %p72 = por %p70, %p71
      %s74 = sadd.s32 %s73, 1
      %p77 = scmp.eq.s32.totalorder %s18, 1
      %p78 = scmp.ne.s32.totalorder %s73, %s75
      %p79 = scmp.eq.s32.totalorder %s18, 0
      %p80 = por %p78, %p79
      %p81 = scmp.ne.s32.totalorder %s73, %s75
      %p82 = scmp.eq.s32.totalorder %s23, 1
      %p83 = por %p81, %p82
      %p84 = scmp.ne.s32.totalorder %s75, %s76
      %p85 = scmp.eq.s32.totalorder %s23, 0
      %p86 = por %p84, %p85
      %p87 = scmp.ne.s32.totalorder %s75, %s76
      %p88 = scmp.eq.s32.totalorder %s24, 1
      %p89 = por %p87, %p88
      %p91 = scmp.ne.s32.totalorder %s76, %s90
      %p92 = scmp.eq.s32.totalorder %s24, 0
      %p93 = por %p91, %p92
      %s95 = sadd.s32 %s94, 1
      %p98 = scmp.eq.s32.totalorder %s18, 1
      %p99 = scmp.ne.s32.totalorder %s94, %s96
      %p100 = scmp.eq.s32.totalorder %s18, 0
      %p101 = por %p99, %p100
      %p102 = scmp.ne.s32.totalorder %s94, %s96
      %p103 = scmp.eq.s32.totalorder %s23, 1
      %p104 = por %p102, %p103
      %p105 = scmp.ne.s32.totalorder %s96, %s97
      %p106 = scmp.eq.s32.totalorder %s23, 0
      %p107 = por %p105, %p106
      %p108 = scmp.ne.s32.totalorder %s96, %s97
      %p109 = scmp.eq.s32.totalorder %s24, 1
      %p110 = por %p108, %p109
      %p112 = scmp.ne.s32.totalorder %s97, %s111
      %p113 = scmp.eq.s32.totalorder %s24, 0
      %p114 = por %p112, %p113
      %s116 = sadd.s32 %s115, 1
      %p119 = scmp.eq.s32.totalorder %s18, 1
      %p120 = scmp.ne.s32.totalorder %s115, %s117
      %p121 = scmp.eq.s32.totalorder %s18, 0
      %p122 = por %p120, %p121
      %p123 = scmp.ne.s32.totalorder %s115, %s117
      %p124 = scmp.eq.s32.totalorder %s23, 1
      %p125 = por %p123, %p124
      %p126 = scmp.ne.s32.totalorder %s117, %s118
      %p127 = scmp.eq.s32.totalorder %s23, 0
      %p128 = por %p126, %p127
      %p129 = scmp.ne.s32.totalorder %s117, %s118
      %p130 = scmp.eq.s32.totalorder %s24, 1
      %p131 = por %p129, %p130
      %p133 = scmp.ne.s32.totalorder %s118, %s132
      %p134 = scmp.eq.s32.totalorder %s24, 0
      %p135 = por %p133, %p134
      %s136 = ssub.s32 %s18, %s25
      %p137 = scmp.eq.s32.totalorder %s136, 0
      %s139 = sadd.s32 %s138, 1
      %s140 = scalar_select %p137, %s138, %s139
      %p143 = pneg %p137
      %p144 = scmp.eq.s32.totalorder %s18, 1
      %p145 = por %p143, %p144
      %p146 = scmp.ne.s32.totalorder %s138, %s141
      %p147 = scmp.eq.s32.totalorder %s18, 0
      %p148 = por %p146, %p147
      %p149 = scmp.ne.s32.totalorder %s138, %s141
      %p150 = scmp.eq.s32.totalorder %s23, 1
      %p151 = por %p149, %p150
      %p152 = scmp.ne.s32.totalorder %s141, %s142
      %p153 = scmp.eq.s32.totalorder %s23, 0
      %p154 = por %p152, %p153
      %p155 = scmp.ne.s32.totalorder %s141, %s142
      %p156 = scmp.eq.s32.totalorder %s24, 1
      %p157 = por %p155, %p156
      %p159 = scmp.ne.s32.totalorder %s142, %s158
      %p160 = scmp.eq.s32.totalorder %s24, 0
      %p161 = por %p159, %p160
      %p162 = scmp.le.s32.totalorder 1, %s18
      %p163 = scmp.lt.s32.totalorder %s18, 3
      %p164 = pnand %p162, %p163
      %p165 = pneg %p164
      // Predicated region
      $region9: #{tpu_custom_call.1} parent=5 // pred_check
        _
      $region10: #{tpu_custom_call.1} parent=5 // pred_check_branch
        %167 = sbr.rel (%p164) target = $region12
      $region11: #{tpu_custom_call.1} parent=5 // pred_region
        %s168 = ssub.s32 %s18, 1
        // Predicated region
        $region13: #{tpu_custom_call.1} parent=11 // pred_check
          %p169 = pneg %p65
        $region14: #{tpu_custom_call.1} parent=11 // pred_check_branch
          %171 = sbr.rel (%p169) target = $region16
        $region15: #{tpu_custom_call.1} parent=11 // pred_region
          %s173 = ssub.s32 3072, 3072
          %174 = vsyncadd [#allocation6], %s173
          %s175 = sshll.u32 [#allocation5], 4
          %s176 = int_to_ptr.vmem [resolvable:$true] %s175
          %181 = dma.hbm_to_vmem [thread:$0]  %s1, 3072, %s176, [#allocation6], 64, 64, 4
        $region16: #{tpu_custom_call.1} parent=11 // pred_fallthru
          _
        // Predicated region
        $region17: #{tpu_custom_call.1} parent=11 // pred_check
          %p182 = pneg %p86
        $region18: #{tpu_custom_call.1} parent=11 // pred_check_branch
          %184 = sbr.rel (%p182) target = $region20
        $region19: #{tpu_custom_call.1} parent=11 // pred_region
          _
        $region20: #{tpu_custom_call.1} parent=11 // pred_fallthru
          _
        // Predicated region
        $region21: #{tpu_custom_call.1} parent=11 // pred_check
          %p185 = pneg %p107
        $region22: #{tpu_custom_call.1} parent=11 // pred_check_branch
          %187 = sbr.rel (%p185) target = $region24
        $region23: #{tpu_custom_call.1} parent=11 // pred_region
          %s189 = ssub.s32 3072, 3072
          %190 = vsyncadd [#allocation6], %s189
          %s191 = sshll.u32 [#allocation7], 4
          %s192 = int_to_ptr.vmem [resolvable:$true] %s191
          %197 = dma.hbm_to_vmem [thread:$0]  %s3, 3072, %s192, [#allocation6], 64, 64, 4
        $region24: #{tpu_custom_call.1} parent=11 // pred_fallthru
          _
        // Predicated region
        $region25: #{tpu_custom_call.1} parent=11 // pred_check
          %p198 = pneg %p128
        $region26: #{tpu_custom_call.1} parent=11 // pred_check_branch
          %200 = sbr.rel (%p198) target = $region28
        $region27: #{tpu_custom_call.1} parent=11 // pred_region
          _
        $region28: #{tpu_custom_call.1} parent=11 // pred_fallthru
          _
      $region12: #{tpu_custom_call.1} parent=5 // pred_fallthru
        _
      %p201 = scmp.lt.s32.totalorder %s18, 2
      // Predicated region
      $region29: #{tpu_custom_call.1} parent=5 // pred_check
        %p202 = pneg %p201
      $region30: #{tpu_custom_call.1} parent=5 // pred_check_branch
        %204 = sbr.rel (%p202) target = $region32
      $region31: #{tpu_custom_call.1} parent=5 // pred_region
        // Predicated region
        $region33: #{tpu_custom_call.1} parent=31 // pred_check
          %p205 = pneg %p38
        $region34: #{tpu_custom_call.1} parent=31 // pred_check_branch
          %207 = sbr.rel (%p205) target = $region36
        $region35: #{tpu_custom_call.1} parent=31 // pred_region
          %s208 = sand.u32 %s28, 1
          %s209 = scalar_lea.sflag [#allocation3], %s208
          %s210 = sand.u32 %s28, 1
          %s211 = smul.addr %s210, 16
          %s212 = scalar_lea.vmem [#allocation2], %s211
          %s214 = ssub.s32 256, 256
          %215 = vsyncadd %s209, %s214
          %s216 = smul.addr %s18, 2
          %s217 = smul.addr %s216, 128
          %s218 = scalar_lea.hbm %s0, %s217
          %s219 = sshll.u32 %s212, 4
          %s220 = int_to_ptr.vmem [resolvable:$true] %s219
          %225 = dma.hbm_to_vmem [thread:$0]  %s218, 256, %s220, %s209, 128, 128, 8
        $region36: #{tpu_custom_call.1} parent=31 // pred_fallthru
          _
      $region32: #{tpu_custom_call.1} parent=5 // pred_fallthru
        _
      %p226 = scmp.le.s32.totalorder 1, %s18
      %p227 = scmp.lt.s32.totalorder %s18, 3
      %p228 = pnand %p226, %p227
      %p229 = pneg %p228
      // Predicated region
      $region37: #{tpu_custom_call.1} parent=5 // pred_check
        _
      $region38: #{tpu_custom_call.1} parent=5 // pred_check_branch
        %231 = sbr.rel (%p228) target = $region40
      $region39: #{tpu_custom_call.1} parent=5 // pred_region
        %s232 = ssub.s32 %s18, 1
        %s233 = sand.u32 %s31, 1
        %s234 = scalar_lea.sflag [#allocation3], %s233
        %s235 = sand.u32 %s31, 1
        %s236 = smul.addr %s235, 16
        %s237 = scalar_lea.vmem [#allocation2], %s236
        // Predicated region
        $region41: #{tpu_custom_call.1} parent=39 // pred_check
          %p238 = pneg %p44
        $region42: #{tpu_custom_call.1} parent=39 // pred_check_branch
          %240 = sbr.rel (%p238) target = $region44
        $region43: #{tpu_custom_call.1} parent=39 // pred_region
          %241 = dma.done %s234, 256
        $region44: #{tpu_custom_call.1} parent=39 // pred_fallthru
          _
        // Predicated region
        $region45: #{tpu_custom_call.1} parent=39 // pred_check
          %p242 = pneg %p65
        $region46: #{tpu_custom_call.1} parent=39 // pred_check_branch
          %244 = sbr.rel (%p242) target = $region48
        $region47: #{tpu_custom_call.1} parent=39 // pred_region
          %245 = dma.done [#allocation6], 3072
        $region48: #{tpu_custom_call.1} parent=39 // pred_fallthru
          _
        // Predicated region
        $region49: #{tpu_custom_call.1} parent=39 // pred_check
          %p246 = pneg %p107
        $region50: #{tpu_custom_call.1} parent=39 // pred_check_branch
          %248 = sbr.rel (%p246) target = $region52
        $region51: #{tpu_custom_call.1} parent=39 // pred_region
          %249 = dma.done [#allocation6], 3072
        $region52: #{tpu_custom_call.1} parent=39 // pred_fallthru
          _
        %s250 = sand.u32 %s31, 1
        %s251 = scalar_lea.sflag [#allocation3], %s250
        %s252 = sand.u32 %s31, 1
        %s253 = smul.addr %s252, 16
        %s254 = scalar_lea.vmem [#allocation2], %s253
        %p255 = pneg %p44
        %p256 = pneg %p41
        %p257 = pneg %p65
        %p258 = pneg %p62
        %p259 = pneg %p86
        %p260 = pneg %p83
        %p261 = pneg %p107
        %p262 = pneg %p104
        %p263 = pneg %p128
        %p264 = pneg %p125
        %p265 = pneg %p154
        %p266 = pneg %p151
        %s267 = sand.u32 %s141, 1
        %s268 = scalar_lea.sflag [#allocation4], %s267
        %s269 = sand.u32 %s141, 1
        %s270 = smul.addr %s269, 16
        %s271 = scalar_lea.vmem [#allocation8], %s270
        %v273 = vld [vmem:[%s237] sm:$0xff]
        %v274 = vld [vmem:[%s237 + $0x8] sm:$0xff]
        %v275 = vpack.c.bf16 %v274, %v273
        %v277 = vshrl.u32 %v275, 16
        %v279 = vrot.slane %v277, 7
        %v280 = vshll.u32 %v275, 16
        %v282 = vor.u32 %v279, %v280
        %vm285 = vcmask 1040384
        %vm286 = vsmask.f32 256
        %vm287 = vmand %vm285, %vm286
        %v288 = vsel %vm287, 0, %v282
        %v289 = vsel %vm287, %v279, 0
        %vm290 = vsmask.f32 7424
        %v292 = vshrl.u32 %v288, 16
        %v294 = vshll.u32 %v288, 16
        %v296 = vrot.slane %v294, 1
        %v297 = vor.u32 %v292, %v296
        %v299 = vshll.u32 %v289, 16
        %v301 = vrot.slane %v299, 1
        %v302 = vsel %vm290, %v297, %v301
        %vm306 = vcmask 1046528
        %v307 = vrot.slane %v288, 1
        %v308 = vrot.slane %v289, 1
        %v309 = vsel %vm306, %v307, %v308
        %v311 = vld [vmem:[#allocation5] sm:$0xf]
        %v312 = vld [vmem:[#allocation5 + $0x4] sm:$0xf]
        %v313 = vld [vmem:[#allocation5 + $0x8] sm:$0xf]
        %v314 = vld [vmem:[#allocation5 + $0xc] sm:$0xf]
        %v315 = vld [vmem:[#allocation5 + $0x10] sm:$0xf]
        %v316 = vld [vmem:[#allocation5 + $0x14] sm:$0xf]
        %v317 = vld [vmem:[#allocation5 + $0x18] sm:$0xf]
        %v318 = vld [vmem:[#allocation5 + $0x1c] sm:$0xf]
        %v319 = vld [vmem:[#allocation5 + $0x20] sm:$0xf]
        %v320 = vld [vmem:[#allocation5 + $0x24] sm:$0xf]
        %v321 = vld [vmem:[#allocation5 + $0x28] sm:$0xf]
        %v322 = vld [vmem:[#allocation5 + $0x2c] sm:$0xf]
        %v323 = vld [vmem:[#allocation5 + $0x30] sm:$0xf]
        %v324 = vld [vmem:[#allocation5 + $0x34] sm:$0xf]
        %v325 = vld [vmem:[#allocation5 + $0x38] sm:$0xf]
        %v326 = vld [vmem:[#allocation5 + $0x3c] sm:$0xf]
        %v327 = vld [vmem:[#allocation5 + $0x40] sm:$0xf]
        %v328 = vld [vmem:[#allocation5 + $0x44] sm:$0xf]
        %v329 = vld [vmem:[#allocation5 + $0x48] sm:$0xf]
        %v330 = vld [vmem:[#allocation5 + $0x4c] sm:$0xf]
        %v331 = vld [vmem:[#allocation5 + $0x50] sm:$0xf]
        %v332 = vld [vmem:[#allocation5 + $0x54] sm:$0xf]
        %v333 = vld [vmem:[#allocation5 + $0x58] sm:$0xf]
        %v334 = vld [vmem:[#allocation5 + $0x5c] sm:$0xf]
        %v335 = vld [vmem:[#allocation5 + $0x60] sm:$0xf]
        %v336 = vld [vmem:[#allocation5 + $0x64] sm:$0xf]
        %v337 = vld [vmem:[#allocation5 + $0x68] sm:$0xf]
        %v338 = vld [vmem:[#allocation5 + $0x6c] sm:$0xf]
        %v339 = vld [vmem:[#allocation5 + $0x70] sm:$0xf]
        %v340 = vld [vmem:[#allocation5 + $0x74] sm:$0xf]
        %v341 = vld [vmem:[#allocation5 + $0x78] sm:$0xf]
        %v342 = vld [vmem:[#allocation5 + $0x7c] sm:$0xf]
        %v343 = vld [vmem:[#allocation5 + $0x80] sm:$0xf]
        %v344 = vld [vmem:[#allocation5 + $0x84] sm:$0xf]
        %v345 = vld [vmem:[#allocation5 + $0x88] sm:$0xf]
        %v346 = vld [vmem:[#allocation5 + $0x8c] sm:$0xf]
        %v347 = vld [vmem:[#allocation5 + $0x90] sm:$0xf]
        %v348 = vld [vmem:[#allocation5 + $0x94] sm:$0xf]
        %v349 = vld [vmem:[#allocation5 + $0x98] sm:$0xf]
        %v350 = vld [vmem:[#allocation5 + $0x9c] sm:$0xf]
        %v351 = vld [vmem:[#allocation5 + $0xa0] sm:$0xf]
        %v352 = vld [vmem:[#allocation5 + $0xa4] sm:$0xf]
        %v353 = vld [vmem:[#allocation5 + $0xa8] sm:$0xf]
        %v354 = vld [vmem:[#allocation5 + $0xac] sm:$0xf]
        %v355 = vld [vmem:[#allocation5 + $0xb0] sm:$0xf]
        %v356 = vld [vmem:[#allocation5 + $0xb4] sm:$0xf]
        %v357 = vld [vmem:[#allocation5 + $0xb8] sm:$0xf]
        %v358 = vld [vmem:[#allocation5 + $0xbc] sm:$0xf]
        %v359 = vld [vmem:[%s2] sm:$0x1]
        %v361 = vlaneseq
        %v362 = vshrl.u32 %v361, 7
        %v363 = vsub.s32 0, %v362
        %v364 = vrot.slane %v359, %v363
        %v414 = vunpack.c.l.b16 %v311
        %v415 = vunpack.c.l.b16 %v312
        %v416 = vunpack.c.l.b16 %v313
        %v417 = vunpack.c.l.b16 %v314
        %v418 = vunpack.c.l.b16 %v315
        %v419 = vunpack.c.l.b16 %v316
        %v420 = vunpack.c.l.b16 %v317
        %v421 = vunpack.c.l.b16 %v318
        %v422 = vunpack.c.l.b16 %v319
        %v423 = vunpack.c.l.b16 %v320
        %v424 = vunpack.c.l.b16 %v321
        %v425 = vunpack.c.l.b16 %v322
        %v426 = vunpack.c.l.b16 %v323
        %v427 = vunpack.c.l.b16 %v324
        %v428 = vunpack.c.l.b16 %v325
        %v429 = vunpack.c.l.b16 %v326
        %v430 = vunpack.c.l.b16 %v327
        %v431 = vunpack.c.l.b16 %v328
        %v432 = vunpack.c.l.b16 %v329
        %v433 = vunpack.c.l.b16 %v330
        %v434 = vunpack.c.l.b16 %v331
        %v435 = vunpack.c.l.b16 %v332
        %v436 = vunpack.c.l.b16 %v333
        %v437 = vunpack.c.l.b16 %v334
        %v438 = vunpack.c.l.b16 %v335
        %v439 = vunpack.c.l.b16 %v336
        %v440 = vunpack.c.l.b16 %v337
        %v441 = vunpack.c.l.b16 %v338
        %v442 = vunpack.c.l.b16 %v339
        %v443 = vunpack.c.l.b16 %v340
        %v444 = vunpack.c.l.b16 %v341
        %v445 = vunpack.c.l.b16 %v342
        %v446 = vunpack.c.l.b16 %v343
        %v447 = vunpack.c.l.b16 %v344
        %v448 = vunpack.c.l.b16 %v345
        %v449 = vunpack.c.l.b16 %v346
        %v450 = vunpack.c.l.b16 %v347
        %v451 = vunpack.c.l.b16 %v348
        %v452 = vunpack.c.l.b16 %v349
        %v453 = vunpack.c.l.b16 %v350
        %v454 = vunpack.c.l.b16 %v351
        %v455 = vunpack.c.l.b16 %v352
        %v456 = vunpack.c.l.b16 %v353
        %v457 = vunpack.c.l.b16 %v354
        %v458 = vunpack.c.l.b16 %v355
        %v459 = vunpack.c.l.b16 %v356
        %v460 = vunpack.c.l.b16 %v357
        %v461 = vunpack.c.l.b16 %v358
        %v462 = vpack.c.b16 %v415, %v414
        %v463 = vpack.c.b16 %v417, %v416
        %v464 = vpack.c.b16 %v419, %v418
        %v465 = vpack.c.b16 %v421, %v420
        %v466 = vpack.c.b16 %v423, %v422
        %v467 = vpack.c.b16 %v425, %v424
        %v468 = vpack.c.b16 %v427, %v426
        %v469 = vpack.c.b16 %v429, %v428
        %v470 = vpack.c.b16 %v431, %v430
        %v471 = vpack.c.b16 %v433, %v432
        %v472 = vpack.c.b16 %v435, %v434
        %v473 = vpack.c.b16 %v437, %v436
        %v474 = vpack.c.b16 %v439, %v438
        %v475 = vpack.c.b16 %v441, %v440
        %v476 = vpack.c.b16 %v443, %v442
        %v477 = vpack.c.b16 %v445, %v444
        %v478 = vpack.c.b16 %v447, %v446
        %v479 = vpack.c.b16 %v449, %v448
        %v480 = vpack.c.b16 %v451, %v450
        %v481 = vpack.c.b16 %v453, %v452
        %v482 = vpack.c.b16 %v455, %v454
        %v483 = vpack.c.b16 %v457, %v456
        %v484 = vpack.c.b16 %v459, %v458
        %v485 = vpack.c.b16 %v461, %v460
        %510 = vmatprep.subr.bf16.mxu0 0
        %511 = vmatpush1.bf16.msra.mxu0 %v462
        %512 = vmatprep.subr.bf16.mxu0 0
        %513 = vmatpush1.bf16.msra.mxu0 %v463
        %514 = vmatprep.subr.bf16.mxu0 0
        %515 = vmatpush1.bf16.msra.mxu0 %v464
        %516 = vmatprep.subr.bf16.mxu0 0
        %517 = vmatpush1.bf16.msra.mxu0 %v465
        %518 = vmatprep.subr.bf16.mxu0 0
        %519 = vmatpush1.bf16.msra.mxu0 %v466
        %520 = vmatprep.subr.bf16.mxu0 0
        %521 = vmatpush1.bf16.msra.mxu0 %v467
        %522 = vmatprep.subr.bf16.mxu0 0
        %523 = vmatpush1.bf16.msra.mxu0 %v468
        %524 = vmatprep.subr.bf16.mxu0 0
        %525 = vmatpush1.bf16.msra.mxu0 %v469
        %526 = vmatprep.subr.bf16.mxu0 0
        %527 = vmatpush1.bf16.msra.mxu0 %v470
        %528 = vmatprep.subr.bf16.mxu0 0
        %529 = vmatpush1.bf16.msra.mxu0 %v471
        %530 = vmatprep.subr.bf16.mxu0 0
        %531 = vmatpush1.bf16.msra.mxu0 %v472
        %532 = vmatprep.subr.bf16.mxu0 0
        %533 = vmatpush1.bf16.msra.mxu0 %v473
        %534 = vmatprep.subr.bf16.mxu0 0
        %535 = vmatpush1.bf16.msra.mxu0 %v474
        %536 = vmatprep.subr.bf16.mxu0 0
        %537 = vmatpush1.bf16.msra.mxu0 %v475
        %538 = vmatprep.subr.bf16.mxu0 0
        %539 = vmatpush1.bf16.msra.mxu0 %v476
        %540 = vmatprep.subr.bf16.mxu0 0
        %541 = vmatpush1.bf16.msra.mxu0 %v477
        %542 = vmatprep.mubr.bf16.mxu0 %v302
        %543 = vmatmul.mubr.bf16.gmra.mrb[0].mxu0 %v288
        %v544 = vpop.f32.mrb[0].mxu0
        %v545 = vadd.f32 %v364, %v544
        %v546 = vpop.f32.mrb[0].mxu0
        %v547 = vpop.f32.mrb[0].mxu0
        %v548 = vadd.f32 %v364, %v547
        %v549 = vpop.f32.mrb[0].mxu0
        %550 = vdwg.mxu0
        %551 = vmatprep.subr.bf16.mxu0 0
        %552 = vmatpush1.bf16.msra.mxu0 %v478
        %553 = vmatprep.subr.bf16.mxu0 0
        %554 = vmatpush1.bf16.msra.mxu0 %v479
        %555 = vmatprep.subr.bf16.mxu0 0
        %556 = vmatpush1.bf16.msra.mxu0 %v480
        %557 = vmatprep.subr.bf16.mxu0 0
        %558 = vmatpush1.bf16.msra.mxu0 %v481
        %559 = vmatprep.subr.bf16.mxu0 0
        %560 = vmatpush1.bf16.msra.mxu0 %v482
        %561 = vmatprep.subr.bf16.mxu0 0
        %562 = vmatpush1.bf16.msra.mxu0 %v483
        %563 = vmatprep.subr.bf16.mxu0 0
        %564 = vmatpush1.bf16.msra.mxu0 %v484
        %565 = vmatprep.subr.bf16.mxu0 0
        %566 = vmatpush1.bf16.msra.mxu0 %v485
        %567 = vmatprep.subr.bf16.mxu0 0
        %568 = vmatpush1.bf16.msra.mxu0 0
        %569 = vmatprep.subr.bf16.mxu0 0
        %570 = vmatpush1.bf16.msra.mxu0 0
        %571 = vmatprep.subr.bf16.mxu0 0
        %572 = vmatpush1.bf16.msra.mxu0 0
        %573 = vmatprep.subr.bf16.mxu0 0
        %574 = vmatpush1.bf16.msra.mxu0 0
        %575 = vmatprep.subr.bf16.mxu0 0
        %576 = vmatpush1.bf16.msra.mxu0 0
        %577 = vmatprep.subr.bf16.mxu0 0
        %578 = vmatpush1.bf16.msra.mxu0 0
        %579 = vmatprep.subr.bf16.mxu0 0
        %580 = vmatpush1.bf16.msra.mxu0 0
        %581 = vmatprep.subr.bf16.mxu0 0
        %582 = vmatpush1.bf16.msra.mxu0 0
        %583 = vmatprep.mubr.bf16.mxu0 0
        %584 = vmatmul.mubr.bf16.gmra.mrb[0].mxu0 %v309
        %v585 = vpop.f32.mrb[0].mxu0
        %v586 = vadd.f32 %v545, %v585
        %v587 = vpop.f32.mrb[0].mxu0
        %v588 = vpop.f32.mrb[0].mxu0
        %v589 = vadd.f32 %v548, %v588
        %v590 = vpop.f32.mrb[0].mxu0
        %591 = vdwg.mxu0
        %v592 = vpack.c.bf16 %v589, %v586
        %v594 = vshrl.u32 %v592, 16
        %v596 = vrot.slane %v594, 7
        %v597 = vshll.u32 %v592, 16
        %v599 = vor.u32 %v596, %v597
        %v602 = vsel %vm287, 0, %v599
        %v603 = vsel %vm287, %v596, 0
        %v605 = vshrl.u32 %v602, 16
        %v607 = vshll.u32 %v602, 16
        %v609 = vrot.slane %v607, 1
        %v610 = vor.u32 %v605, %v609
        %v612 = vshll.u32 %v603, 16
        %v614 = vrot.slane %v612, 1
        %v615 = vsel %vm290, %v610, %v614
        %v619 = vrot.slane %v602, 1
        %v620 = vrot.slane %v603, 1
        %v621 = vsel %vm306, %v619, %v620
        %v623 = vld [vmem:[#allocation7] sm:$0xf]
        %v624 = vld [vmem:[#allocation7 + $0x4] sm:$0xf]
        %v625 = vld [vmem:[#allocation7 + $0x8] sm:$0xf]
        %v626 = vld [vmem:[#allocation7 + $0xc] sm:$0xf]
        %v627 = vld [vmem:[#allocation7 + $0x10] sm:$0xf]
        %v628 = vld [vmem:[#allocation7 + $0x14] sm:$0xf]
        %v629 = vld [vmem:[#allocation7 + $0x18] sm:$0xf]
        %v630 = vld [vmem:[#allocation7 + $0x1c] sm:$0xf]
        %v631 = vld [vmem:[#allocation7 + $0x20] sm:$0xf]
        %v632 = vld [vmem:[#allocation7 + $0x24] sm:$0xf]
        %v633 = vld [vmem:[#allocation7 + $0x28] sm:$0xf]
        %v634 = vld [vmem:[#allocation7 + $0x2c] sm:$0xf]
        %v635 = vld [vmem:[#allocation7 + $0x30] sm:$0xf]
        %v636 = vld [vmem:[#allocation7 + $0x34] sm:$0xf]
        %v637 = vld [vmem:[#allocation7 + $0x38] sm:$0xf]
        %v638 = vld [vmem:[#allocation7 + $0x3c] sm:$0xf]
        %v639 = vld [vmem:[#allocation7 + $0x40] sm:$0xf]
        %v640 = vld [vmem:[#allocation7 + $0x44] sm:$0xf]
        %v641 = vld [vmem:[#allocation7 + $0x48] sm:$0xf]
        %v642 = vld [vmem:[#allocation7 + $0x4c] sm:$0xf]
        %v643 = vld [vmem:[#allocation7 + $0x50] sm:$0xf]
        %v644 = vld [vmem:[#allocation7 + $0x54] sm:$0xf]
        %v645 = vld [vmem:[#allocation7 + $0x58] sm:$0xf]
        %v646 = vld [vmem:[#allocation7 + $0x5c] sm:$0xf]
        %v647 = vld [vmem:[#allocation7 + $0x60] sm:$0xf]
        %v648 = vld [vmem:[#allocation7 + $0x64] sm:$0xf]
        %v649 = vld [vmem:[#allocation7 + $0x68] sm:$0xf]
        %v650 = vld [vmem:[#allocation7 + $0x6c] sm:$0xf]
        %v651 = vld [vmem:[#allocation7 + $0x70] sm:$0xf]
        %v652 = vld [vmem:[#allocation7 + $0x74] sm:$0xf]
        %v653 = vld [vmem:[#allocation7 + $0x78] sm:$0xf]
        %v654 = vld [vmem:[#allocation7 + $0x7c] sm:$0xf]
        %v655 = vld [vmem:[#allocation7 + $0x80] sm:$0xf]
        %v656 = vld [vmem:[#allocation7 + $0x84] sm:$0xf]
        %v657 = vld [vmem:[#allocation7 + $0x88] sm:$0xf]
        %v658 = vld [vmem:[#allocation7 + $0x8c] sm:$0xf]
        %v659 = vld [vmem:[#allocation7 + $0x90] sm:$0xf]
        %v660 = vld [vmem:[#allocation7 + $0x94] sm:$0xf]
        %v661 = vld [vmem:[#allocation7 + $0x98] sm:$0xf]
        %v662 = vld [vmem:[#allocation7 + $0x9c] sm:$0xf]
        %v663 = vld [vmem:[#allocation7 + $0xa0] sm:$0xf]
        %v664 = vld [vmem:[#allocation7 + $0xa4] sm:$0xf]
        %v665 = vld [vmem:[#allocation7 + $0xa8] sm:$0xf]
        %v666 = vld [vmem:[#allocation7 + $0xac] sm:$0xf]
        %v667 = vld [vmem:[#allocation7 + $0xb0] sm:$0xf]
        %v668 = vld [vmem:[#allocation7 + $0xb4] sm:$0xf]
        %v669 = vld [vmem:[#allocation7 + $0xb8] sm:$0xf]
        %v670 = vld [vmem:[#allocation7 + $0xbc] sm:$0xf]
        %v671 = vld [vmem:[%s4] sm:$0x1]
        %v673 = vlaneseq
        %v674 = vshrl.u32 %v673, 7
        %v675 = vsub.s32 0, %v674
        %v676 = vrot.slane %v671, %v675
        %v726 = vunpack.c.l.b16 %v623
        %v727 = vunpack.c.l.b16 %v624
        %v728 = vunpack.c.l.b16 %v625
        %v729 = vunpack.c.l.b16 %v626
        %v730 = vunpack.c.l.b16 %v627
        %v731 = vunpack.c.l.b16 %v628
        %v732 = vunpack.c.l.b16 %v629
        %v733 = vunpack.c.l.b16 %v630
        %v734 = vunpack.c.l.b16 %v631
        %v735 = vunpack.c.l.b16 %v632
        %v736 = vunpack.c.l.b16 %v633
        %v737 = vunpack.c.l.b16 %v634
        %v738 = vunpack.c.l.b16 %v635
        %v739 = vunpack.c.l.b16 %v636
        %v740 = vunpack.c.l.b16 %v637
        %v741 = vunpack.c.l.b16 %v638
        %v742 = vunpack.c.l.b16 %v639
        %v743 = vunpack.c.l.b16 %v640
        %v744 = vunpack.c.l.b16 %v641
        %v745 = vunpack.c.l.b16 %v642
        %v746 = vunpack.c.l.b16 %v643
        %v747 = vunpack.c.l.b16 %v644
        %v748 = vunpack.c.l.b16 %v645
        %v749 = vunpack.c.l.b16 %v646
        %v750 = vunpack.c.l.b16 %v647
        %v751 = vunpack.c.l.b16 %v648
        %v752 = vunpack.c.l.b16 %v649
        %v753 = vunpack.c.l.b16 %v650
        %v754 = vunpack.c.l.b16 %v651
        %v755 = vunpack.c.l.b16 %v652
        %v756 = vunpack.c.l.b16 %v653
        %v757 = vunpack.c.l.b16 %v654
        %v758 = vunpack.c.l.b16 %v655
        %v759 = vunpack.c.l.b16 %v656
        %v760 = vunpack.c.l.b16 %v657
        %v761 = vunpack.c.l.b16 %v658
        %v762 = vunpack.c.l.b16 %v659
        %v763 = vunpack.c.l.b16 %v660
        %v764 = vunpack.c.l.b16 %v661
        %v765 = vunpack.c.l.b16 %v662
        %v766 = vunpack.c.l.b16 %v663
        %v767 = vunpack.c.l.b16 %v664
        %v768 = vunpack.c.l.b16 %v665
        %v769 = vunpack.c.l.b16 %v666
        %v770 = vunpack.c.l.b16 %v667
        %v771 = vunpack.c.l.b16 %v668
        %v772 = vunpack.c.l.b16 %v669
        %v773 = vunpack.c.l.b16 %v670
        %v774 = vpack.c.b16 %v727, %v726
        %v775 = vpack.c.b16 %v729, %v728
        %v776 = vpack.c.b16 %v731, %v730
        %v777 = vpack.c.b16 %v733, %v732
        %v778 = vpack.c.b16 %v735, %v734
        %v779 = vpack.c.b16 %v737, %v736
        %v780 = vpack.c.b16 %v739, %v738
        %v781 = vpack.c.b16 %v741, %v740
        %v782 = vpack.c.b16 %v743, %v742
        %v783 = vpack.c.b16 %v745, %v744
        %v784 = vpack.c.b16 %v747, %v746
        %v785 = vpack.c.b16 %v749, %v748
        %v786 = vpack.c.b16 %v751, %v750
        %v787 = vpack.c.b16 %v753, %v752
        %v788 = vpack.c.b16 %v755, %v754
        %v789 = vpack.c.b16 %v757, %v756
        %v790 = vpack.c.b16 %v759, %v758
        %v791 = vpack.c.b16 %v761, %v760
        %v792 = vpack.c.b16 %v763, %v762
        %v793 = vpack.c.b16 %v765, %v764
        %v794 = vpack.c.b16 %v767, %v766
        %v795 = vpack.c.b16 %v769, %v768
        %v796 = vpack.c.b16 %v771, %v770
        %v797 = vpack.c.b16 %v773, %v772
        %822 = vmatprep.subr.bf16.mxu0 0
        %823 = vmatpush1.bf16.msra.mxu0 %v774
        %824 = vmatprep.subr.bf16.mxu0 0
        %825 = vmatpush1.bf16.msra.mxu0 %v775
        %826 = vmatprep.subr.bf16.mxu0 0
        %827 = vmatpush1.bf16.msra.mxu0 %v776
        %828 = vmatprep.subr.bf16.mxu0 0
        %829 = vmatpush1.bf16.msra.mxu0 %v777
        %830 = vmatprep.subr.bf16.mxu0 0
        %831 = vmatpush1.bf16.msra.mxu0 %v778
        %832 = vmatprep.subr.bf16.mxu0 0
        %833 = vmatpush1.bf16.msra.mxu0 %v779
        %834 = vmatprep.subr.bf16.mxu0 0
        %835 = vmatpush1.bf16.msra.mxu0 %v780
        %836 = vmatprep.subr.bf16.mxu0 0
        %837 = vmatpush1.bf16.msra.mxu0 %v781
        %838 = vmatprep.subr.bf16.mxu0 0
        %839 = vmatpush1.bf16.msra.mxu0 %v782
        %840 = vmatprep.subr.bf16.mxu0 0
        %841 = vmatpush1.bf16.msra.mxu0 %v783
        %842 = vmatprep.subr.bf16.mxu0 0
        %843 = vmatpush1.bf16.msra.mxu0 %v784
        %844 = vmatprep.subr.bf16.mxu0 0
        %845 = vmatpush1.bf16.msra.mxu0 %v785
        %846 = vmatprep.subr.bf16.mxu0 0
        %847 = vmatpush1.bf16.msra.mxu0 %v786
        %848 = vmatprep.subr.bf16.mxu0 0
        %849 = vmatpush1.bf16.msra.mxu0 %v787
        %850 = vmatprep.subr.bf16.mxu0 0
        %851 = vmatpush1.bf16.msra.mxu0 %v788
        %852 = vmatprep.subr.bf16.mxu0 0
        %853 = vmatpush1.bf16.msra.mxu0 %v789
        %854 = vmatprep.mubr.bf16.mxu0 %v615
        %855 = vmatmul.mubr.bf16.gmra.mrb[0].mxu0 %v602
        %v856 = vpop.f32.mrb[0].mxu0
        %v857 = vadd.f32 %v676, %v856
        %v858 = vpop.f32.mrb[0].mxu0
        %v859 = vpop.f32.mrb[0].mxu0
        %v860 = vadd.f32 %v676, %v859
        %v861 = vpop.f32.mrb[0].mxu0
        %862 = vdwg.mxu0
        %863 = vmatprep.subr.bf16.mxu0 0
        %864 = vmatpush1.bf16.msra.mxu0 %v790
        %865 = vmatprep.subr.bf16.mxu0 0
        %866 = vmatpush1.bf16.msra.mxu0 %v791
        %867 = vmatprep.subr.bf16.mxu0 0
        %868 = vmatpush1.bf16.msra.mxu0 %v792
        %869 = vmatprep.subr.bf16.mxu0 0
        %870 = vmatpush1.bf16.msra.mxu0 %v793
        %871 = vmatprep.subr.bf16.mxu0 0
        %872 = vmatpush1.bf16.msra.mxu0 %v794
        %873 = vmatprep.subr.bf16.mxu0 0
        %874 = vmatpush1.bf16.msra.mxu0 %v795
        %875 = vmatprep.subr.bf16.mxu0 0
        %876 = vmatpush1.bf16.msra.mxu0 %v796
        %877 = vmatprep.subr.bf16.mxu0 0
        %878 = vmatpush1.bf16.msra.mxu0 %v797
        %879 = vmatprep.subr.bf16.mxu0 0
        %880 = vmatpush1.bf16.msra.mxu0 0
        %881 = vmatprep.subr.bf16.mxu0 0
        %882 = vmatpush1.bf16.msra.mxu0 0
        %883 = vmatprep.subr.bf16.mxu0 0
        %884 = vmatpush1.bf16.msra.mxu0 0
        %885 = vmatprep.subr.bf16.mxu0 0
        %886 = vmatpush1.bf16.msra.mxu0 0
        %887 = vmatprep.subr.bf16.mxu0 0
        %888 = vmatpush1.bf16.msra.mxu0 0
        %889 = vmatprep.subr.bf16.mxu0 0
        %890 = vmatpush1.bf16.msra.mxu0 0
        %891 = vmatprep.subr.bf16.mxu0 0
        %892 = vmatpush1.bf16.msra.mxu0 0
        %893 = vmatprep.subr.bf16.mxu0 0
        %894 = vmatpush1.bf16.msra.mxu0 0
        %895 = vmatprep.mubr.bf16.mxu0 0
        %896 = vmatmul.mubr.bf16.gmra.mrb[0].mxu0 %v621
        %v897 = vpop.f32.mrb[0].mxu0
        %v898 = vadd.f32 %v857, %v897
        %v899 = vpop.f32.mrb[0].mxu0
        %v900 = vpop.f32.mrb[0].mxu0
        %v901 = vadd.f32 %v860, %v900
        %v902 = vpop.f32.mrb[0].mxu0
        %903 = vdwg.mxu0
        %v904 = vadd.f32 %v273, %v898
        %v905 = vadd.f32 %v274, %v901
        %v906 = vmax.f32 %v904, 0.0
        %v907 = vmax.f32 %v905, 0.0
        %908 = vst [vmem:[%s271] sm:$0xff] %v906
        %909 = vst [vmem:[%s271 + $0x8] sm:$0xff] %v907
        %s910 = sand.u32 %s141, 1
        %s911 = scalar_lea.sflag [#allocation4], %s910
        %s912 = sand.u32 %s141, 1
        %s913 = smul.addr %s912, 16
        %s914 = scalar_lea.vmem [#allocation8], %s913
        // Predicated region
        $region53: #{tpu_custom_call.1} parent=39 // pred_check
          %p915 = pneg %p151
        $region54: #{tpu_custom_call.1} parent=39 // pred_check_branch
          %917 = sbr.rel (%p915) target = $region56
        $region55: #{tpu_custom_call.1} parent=39 // pred_region
          %s919 = ssub.s32 256, 256
          %920 = vsyncadd %s911, %s919
          %s921 = smul.addr %s23, 2
          %s922 = smul.addr %s921, 128
          %s923 = scalar_lea.hbm %s5, %s922
          %s924 = sshll.u32 %s914, 4
          %s925 = int_to_ptr.vmem [resolvable:$true] %s924
          %930 = dma.vmem_to_hbm [thread:$0]  %s925, 256, %s923, %s911, 128, 128, 8
        $region56: #{tpu_custom_call.1} parent=39 // pred_fallthru
          _
      $region40: #{tpu_custom_call.1} parent=5 // pred_fallthru
        _
      %p931 = scmp.le.s32.totalorder 2, %s18
      // Predicated region
      $region57: #{tpu_custom_call.1} parent=5 // pred_check
        %p932 = pneg %p931
      $region58: #{tpu_custom_call.1} parent=5 // pred_check_branch
        %934 = sbr.rel (%p932) target = $region60
      $region59: #{tpu_custom_call.1} parent=5 // pred_region
        %s935 = ssub.s32 %s18, 2
        // Predicated region
        $region61: #{tpu_custom_call.1} parent=59 // pred_check
          %p936 = pneg %p157
        $region62: #{tpu_custom_call.1} parent=59 // pred_check_branch
          %938 = sbr.rel (%p936) target = $region64
        $region63: #{tpu_custom_call.1} parent=59 // pred_region
          %s939 = sand.u32 %s142, 1
          %s940 = scalar_lea.sflag [#allocation4], %s939
          %s941 = sand.u32 %s142, 1
          %s942 = smul.addr %s941, 16
          %s943 = scalar_lea.vmem [#allocation8], %s942
          %944 = dma.done %s940, 256
        $region64: #{tpu_custom_call.1} parent=59 // pred_fallthru
          _
      $region60: #{tpu_custom_call.1} parent=5 // pred_fallthru
        _
    $region6: #{tpu_custom_call.1} parent=1 // loop_footer
      %s22 = sadd.s32 1, %s18
    $region7: #{tpu_custom_call.1} parent=1 // loop_footer_branch
      %17 = sbr.rel target = $region3
    $region8: #{tpu_custom_call.1} parent=1 // loop_exit
      _
    %945 = vsyncpa [#allocation3], 1
    %s946 = scalar_lea.sflag [#allocation3], 1
    %947 = vsyncpa %s946, 1
    %948 = vsyncpa [#allocation6], 1
    %949 = vsyncpa [#allocation4], 1
    %s950 = scalar_lea.sflag [#allocation4], 1
    %951 = vsyncpa %s950, 1

</llo_original>
